<compile_context>
chip_gen: v7x
topology: tpu7x:2x2x1
jax: 0.10.0
libtpu: 0.0.40
codegen_flags: <defaults>
</compile_context>

<pallas_src>
import math
from functools import partial

import jax
import jax.numpy as jnp
from jax import lax
from jax.experimental import pallas as pl
from jax.experimental.pallas import tpu as pltpu


def _round_up(x, m):
    return ((x + m - 1) // m) * m


def _chip_info():
    """Best-effort hardware query with safe (v7x-conservative) defaults."""
    vmem_cap = 64 * 1024 * 1024
    kind = ""
    try:
        vmem_cap = int(pltpu.get_tpu_info().vmem_capacity_bytes)
    except Exception:
        pass
    try:
        kind = jax.devices()[0].device_kind.lower()
    except Exception:
        pass
    # Default scoped-VMEM limit is per-generation (16 MiB on v5e, 32 MiB v6e/v7x).
    default_scoped = 16 * 1024 * 1024 if "v5" in kind else 32 * 1024 * 1024
    has_bf16_valu = "v5" not in kind     # v5e VPU has no bf16 lanes
    return vmem_cap, kind, default_scoped, has_bf16_valu


# ---------------------------------------------------------------------------
# Fused-gather kernel: tables resident in VMEM (single-buffered), per-edge rows
# gathered on the MXU via exact 0/1 one-hot matmuls.  Layout is [H, tile_e]
# (edges on the 128-lane axis) so the H-reduction stores lane-dense.
# ---------------------------------------------------------------------------
def _distmult_fused_kernel(src_ref, dst_ref, typ_ref, zt_ref, relt_ref, out_ref):
    n_nodes = zt_ref.shape[1]
    n_rel = relt_ref.shape[1]
    tile_e = src_ref.shape[1]

    src = src_ref[...]            # (1, T) int32, edges on lanes
    dst = dst_ref[...]
    typ = typ_ref[...]
    z_tab = zt_ref[...]           # (H, N) resident
    rel_tab = relt_ref[...]       # (H, R) resident

    # TODO(synk): if a bundle dump shows the iota / (N,T) compare dominating for
    # large N, cache the iotas in VMEM scratch (init under pl.when(pid==0)) or
    # switch the node gathers to jnp.take on the resident table.
    node_iota = lax.broadcasted_iota(jnp.int32, (n_nodes, tile_e), 0)
    rel_iota = lax.broadcasted_iota(jnp.int32, (n_rel, tile_e), 0)
    # Single compare + cast (no jnp.where, no f32 selector temporaries).
    src_oh = (node_iota == src).astype(z_tab.dtype)
    dst_oh = (node_iota == dst).astype(z_tab.dtype)
    typ_oh = (rel_iota == typ).astype(rel_tab.dtype)

    # Exact row gather on the otherwise-idle MXU: (H, N) @ (N, T) -> (H, T).
    z_src = jnp.dot(z_tab, src_oh, preferred_element_type=jnp.float32)
    z_dst = jnp.dot(z_tab, dst_oh, preferred_element_type=jnp.float32)
    rel = jnp.dot(rel_tab, typ_oh, preferred_element_type=jnp.float32)

    out_ref[...] = jnp.sum(z_src * rel * z_dst, axis=0, keepdims=True)  # (1, T)


# ---------------------------------------------------------------------------
# Streaming kernel (XLA gathers): fused multiply + hidden reduction on
# pre-gathered [tile_e, H] tiles.
# ---------------------------------------------------------------------------
def _distmult_streaming_kernel(zs_ref, zd_ref, rel_ref, out_ref, *,
                               low_precision_mul):
    if low_precision_mul:
        # bf16 multiplies (packed VALU on v6e/v7x), f32 reduction.
        prod = (zs_ref[...] * rel_ref[...] * zd_ref[...]).astype(jnp.float32)
    else:
        prod = (zs_ref[...].astype(jnp.float32)
                * rel_ref[...].astype(jnp.float32)
                * zd_ref[...].astype(jnp.float32))
    # TODO(synk): restructure to a lane-dense (1, tile_e) output slab if the
    # (tile_e, 1) masked store / XLU reduce ever shows up on the critical path.
    out_ref[...] = jnp.sum(prod, axis=1, keepdims=True)   # (tile_e, 1)


# ---------------------------------------------------------------------------
# Streaming kernel (in-kernel DMA gather): z / rel stay in HBM, per-edge rows
# are gathered with async copies into chunked double-buffered VMEM scratch.
# Edge ids come in via scalar prefetch (SMEM).
# ---------------------------------------------------------------------------
def _distmult_dma_gather_kernel(src_ref, dst_ref, typ_ref,     # SMEM (e_pad,) int32
                                z_hbm, rel_hbm,                # pl.ANY (HBM)
                                out_ref,                       # (tile_e, 1) f32
                                zs_buf, zd_buf, rl_buf,        # VMEM (2, chunk, H)
                                sems,                          # DMA sems (2, 3)
                                *, low_precision_mul):
    tile_e = out_ref.shape[0]
    chunk = zs_buf.shape[1]
    n_chunks = tile_e // chunk
    tile_start = pl.program_id(0) * tile_e

    def issue_chunk(c, slot):
        base = tile_start + c * chunk

        def body(r, carry):
            s = src_ref[base + r]
            d = dst_ref[base + r]
            t = typ_ref[base + r]
            pltpu.make_async_copy(z_hbm.at[pl.ds(s, 1)],
                                  zs_buf.at[slot, pl.ds(r, 1)],
                                  sems.at[slot, 0]).start()
            pltpu.make_async_copy(z_hbm.at[pl.ds(d, 1)],
                                  zd_buf.at[slot, pl.ds(r, 1)],
                                  sems.at[slot, 1]).start()
            pltpu.make_async_copy(rel_hbm.at[pl.ds(t, 1)],
                                  rl_buf.at[slot, pl.ds(r, 1)],
                                  sems.at[slot, 2]).start()
            return carry

        lax.fori_loop(0, chunk, body, 0)

    def wait_chunk(slot):
        def body(r, carry):
            pltpu.make_async_copy(z_hbm.at[pl.ds(0, 1)],
                                  zs_buf.at[slot, pl.ds(r, 1)],
                                  sems.at[slot, 0]).wait()
            pltpu.make_async_copy(z_hbm.at[pl.ds(0, 1)],
                                  zd_buf.at[slot, pl.ds(r, 1)],
                                  sems.at[slot, 1]).wait()
            pltpu.make_async_copy(rel_hbm.at[pl.ds(0, 1)],
                                  rl_buf.at[slot, pl.ds(r, 1)],
                                  sems.at[slot, 2]).wait()
            return carry

        lax.fori_loop(0, chunk, body, 0)

    issue_chunk(0, 0)

    @pl.loop(0, n_chunks)
    def _(c):
        slot = c & 1
        wait_chunk(slot)

        @pl.when(c + 1 < n_chunks)
        def _():
            issue_chunk(c + 1, 1 - slot)     # overlap next-chunk DMA with compute

        zs = zs_buf[slot]
        zd = zd_buf[slot]
        rl = rl_buf[slot]
        if low_precision_mul:
            prod = (zs * rl * zd).astype(jnp.float32)
        else:
            prod = (zs.astype(jnp.float32) * rl.astype(jnp.float32)
                    * zd.astype(jnp.float32))
        row0 = pl.multiple_of(c * chunk, chunk)
        out_ref[pl.ds(row0, chunk), :] = jnp.sum(prod, axis=1, keepdims=True)


# ---------------------------------------------------------------------------
# Wrapper
# ---------------------------------------------------------------------------
def distmult_decode(z, edge_index, edge_type, rel_emb, *,
                    mode="auto",
                    transport_dtype=jnp.float32,
                    stream_tile_e=2048,
                    dma_chunk=128):
    """DistMult scoring; returns an [E] float32 array of scores.

    transport_dtype: dtype used to move embeddings through HBM/VMEM.  float32
      (default) reproduces the PyTorch module exactly; bfloat16 halves HBM
      bytes (reduction still accumulates in f32).
    mode: "auto" | "fused" | "stream_dma" | "stream_xla".
    """
    n_nodes, hidden = z.shape
    n_rel = rel_emb.shape[0]
    n_edges = edge_index.shape[1]

    if n_edges == 0:
        return jnp.zeros((0,), jnp.float32)

    vmem_cap, kind, default_scoped, has_bf16_valu = _chip_info()
    itemsize = jnp.dtype(transport_dtype).itemsize

    src = edge_index[0].astype(jnp.int32)
    dst = edge_index[1].astype(jnp.int32)
    typ = edge_type.astype(jnp.int32)
    z_t = z.astype(transport_dtype)
    rel_t = rel_emb.astype(transport_dtype)

    # --- Fused-path VMEM accounting (tables single-buffered, selectors as
    #     bool-compare + cast, f32 gathered rows + product temporary). ---
    def fused_bytes(te):
        tables = (n_nodes + n_rel) * hidden * itemsize          # Buffered(1)
        ids = 3 * te * 4 * 2                                    # double-buffered
        outs = te * 4 * 2
        sel = (2 * n_nodes + n_rel) * te * (1 + itemsize)       # bool cmp + cast
        rows = 3 * hidden * te * 4                              # gathered rows f32
        prod = hidden * te * 4
        return tables + ids + outs + sel + rows + prod

    # Per-generation fused tile ceiling: 1024 on 128 MiB chips (v5e/v6e),
    # 512 on v7x's 64 MiB/TC.
    fused_tile_ceiling = 1024 if vmem_cap >= 96 * 1024 * 1024 else 512
    max_tile = min(fused_tile_ceiling, _round_up(n_edges, 128))
    fused_budget = int(0.5 * vmem_cap)
    fused_tile = None
    for cand in (1024, 512, 256, 128):
        if cand <= max_tile and fused_bytes(cand) <= fused_budget:
            fused_tile = cand
            break

    # Compute-roofline gate: one-hot gather costs O(N) per edge; crossover vs
    # the HBM-bound streaming path is ~1-2K nodes on v6e, smaller on v5e/v7x.
    node_thresh = 2048 if "v6" in kind else 1024
    fused_ok = (itemsize <= 2 and fused_tile is not None
                and n_nodes <= node_thresh and n_rel <= 512)

    if mode == "auto":
        if fused_ok:
            mode = "fused"
        elif hidden * itemsize >= 256 and n_edges <= 16384:
            # Per-row DMA gather only pays off for >=256 B rows; scalar-
            # prefetched id vectors must also fit SMEM.
            # TODO(synk): for very large E, move the id vectors to per-tile SMEM
            # blocks instead of whole-array scalar prefetch.
            mode = "stream_dma"
        else:
            mode = "stream_xla"

    # TODO(synk): verify in a trace that the single "parallel" edge-tile axis
    # actually shards across v7x's two TensorCores; if not, add an explicit
    # leading core axis (each TC then holds its own resident tables).
    if mode == "fused":
        if itemsize > 2:
            raise ValueError("fused mode requires a <=16-bit transport dtype "
                             "(e.g. bfloat16)")
        tile_e = fused_tile if fused_tile is not None else 128
        e_pad = _round_up(n_edges, tile_e)
        pad = e_pad - n_edges
        src2 = jnp.pad(src, (0, pad)).reshape(1, e_pad)
        dst2 = jnp.pad(dst, (0, pad)).reshape(1, e_pad)
        typ2 = jnp.pad(typ, (0, pad)).reshape(1, e_pad)
        zt = z_t.T                       # (H, N), tiny one-time XLA transpose
        relt = rel_t.T                   # (H, R)
        need = fused_bytes(tile_e)
        vmem_limit = min(int(0.9 * vmem_cap), max(default_scoped, 2 * need))
        out = pl.pallas_call(
            _distmult_fused_kernel,
            out_shape=jax.ShapeDtypeStruct((1, e_pad), jnp.float32),
            grid_spec=pltpu.PrefetchScalarGridSpec(
                num_scalar_prefetch=0,
                grid=(e_pad // tile_e,),
                in_specs=[
                    pl.BlockSpec((1, tile_e), lambda i: (0, i)),   # src ids
                    pl.BlockSpec((1, tile_e), lambda i: (0, i)),   # dst ids
                    pl.BlockSpec((1, tile_e), lambda i: (0, i)),   # rel ids
                    # Resident tables: constant block index, single-buffered.
                    pl.BlockSpec((hidden, n_nodes), lambda i: (0, 0),
                                 pipeline_mode=pl.Buffered(1)),
                    pl.BlockSpec((hidden, n_rel), lambda i: (0, 0),
                                 pipeline_mode=pl.Buffered(1)),
                ],
                out_specs=pl.BlockSpec((1, tile_e), lambda i: (0, i)),
            ),
            compiler_params=pltpu.CompilerParams(
                dimension_semantics=("parallel",),
                vmem_limit_bytes=vmem_limit,
            ),
        )(src2, dst2, typ2, zt, relt)
        return out[0, :n_edges]

    # Streaming paths share tile sizing (HBM-bound; decoupled from fused tile).
    tile_e = min(_round_up(stream_tile_e, 128), _round_up(n_edges, 128))
    e_pad = _round_up(n_edges, tile_e)
    pad = e_pad - n_edges
    src1 = jnp.pad(src, (0, pad))
    dst1 = jnp.pad(dst, (0, pad))
    typ1 = jnp.pad(typ, (0, pad))
    low_prec = bool(itemsize <= 2 and has_bf16_valu)

    if mode == "stream_dma":
        chunk = max(8, min(int(dma_chunk), tile_e))
        chunk -= chunk % 8
        if tile_e % chunk != 0:
            chunk = 128 if tile_e % 128 == 0 else 8
        kernel = partial(_distmult_dma_gather_kernel, low_precision_mul=low_prec)
        out = pl.pallas_call(
            kernel,
            out_shape=jax.ShapeDtypeStruct((e_pad, 1), jnp.float32),
            grid_spec=pltpu.PrefetchScalarGridSpec(
                num_scalar_prefetch=3,                    # src/dst/typ -> SMEM
                grid=(e_pad // tile_e,),
                in_specs=[
                    pl.BlockSpec(memory_space=pl.ANY),    # z stays in HBM
                    pl.BlockSpec(memory_space=pl.ANY),    # rel_emb stays in HBM
                ],
                out_specs=pl.BlockSpec((tile_e, 1), lambda i, s, d, t: (i, 0)),
                scratch_shapes=[
                    pltpu.VMEM((2, chunk, hidden), z_t.dtype),
                    pltpu.VMEM((2, chunk, hidden), z_t.dtype),
                    pltpu.VMEM((2, chunk, hidden), rel_t.dtype),
                    pltpu.SemaphoreType.DMA((2, 3)),
                ],
            ),
            compiler_params=pltpu.CompilerParams(
                dimension_semantics=("parallel",),
            ),
        )(src1, dst1, typ1, z_t, rel_t)
        return out[:n_edges, 0]

    if mode != "stream_xla":
        raise ValueError(f"unknown mode: {mode!r}")

    # stream_xla: gathers stay in XLA glue (used for small rows / huge E).
    z_src = z_t[src1]          # (e_pad, H)
    z_dst = z_t[dst1]
    rel_g = rel_t[typ1]
    kernel = partial(_distmult_streaming_kernel, low_precision_mul=low_prec)
    out = pl.pallas_call(
        kernel,
        out_shape=jax.ShapeDtypeStruct((e_pad, 1), jnp.float32),
        grid_spec=pltpu.PrefetchScalarGridSpec(
            num_scalar_prefetch=0,
            grid=(e_pad // tile_e,),
            in_specs=[
                pl.BlockSpec((tile_e, hidden), lambda i: (i, 0)),
                pl.BlockSpec((tile_e, hidden), lambda i: (i, 0)),
                pl.BlockSpec((tile_e, hidden), lambda i: (i, 0)),
            ],
            out_specs=pl.BlockSpec((tile_e, 1), lambda i: (i, 0)),
        ),
        compiler_params=pltpu.CompilerParams(
            dimension_semantics=("parallel",),
        ),
    )(z_src, z_dst, rel_g)
    return out[:n_edges, 0]


def init_rel_emb(key, num_relations, hidden_channels, dtype=jnp.float32):
    """Deterministic xavier_uniform_ equivalent for rel_emb."""
    bound = math.sqrt(6.0 / (num_relations + hidden_channels))
    return jax.random.uniform(
        key, (num_relations, hidden_channels),
        minval=-bound, maxval=bound, dtype=dtype,
    )


if __name__ == "__main__":
    # Small, deterministic test shapes.
    num_nodes = 16
    hidden_channels = 32
    num_relations = 4
    num_edges = 16

    root = jax.random.PRNGKey(0)
    k_z, k_rel, k_src, k_dst, k_type = jax.random.split(root, 5)

    z = jax.random.normal(k_z, (num_nodes, hidden_channels), dtype=jnp.float32)
    rel_emb = init_rel_emb(k_rel, num_relations, hidden_channels)
    edge_src = jax.random.randint(k_src, (num_edges,), 0, num_nodes)
    edge_dst = jax.random.randint(k_dst, (num_edges,), 0, num_nodes)
    edge_index = jnp.stack([edge_src, edge_dst], axis=0)       # [2, E]
    edge_type = jax.random.randint(k_type, (num_edges,), 0, num_relations)

    # References.
    ref_f32 = jnp.sum(z[edge_index[0]] * rel_emb[edge_type] * z[edge_index[1]],
                      axis=1)
    z_q = z.astype(jnp.bfloat16).astype(jnp.float32)
    rel_q = rel_emb.astype(jnp.bfloat16).astype(jnp.float32)
    ref_bf16 = jnp.sum(z_q[edge_index[0]] * rel_q[edge_type] * z_q[edge_index[1]],
                       axis=1)

    # 0) Zero-edge edge case (no zero-size grid).
    s0 = distmult_decode(z, jnp.zeros((2, 0), jnp.int32),
                         jnp.zeros((0,), jnp.int32), rel_emb)
    assert s0.shape == (0,)

    # 1) Default path: f32 transport, exact PyTorch numerics.
    s1 = jax.block_until_ready(distmult_decode(z, edge_index, edge_type, rel_emb))
    assert s1.shape == (num_edges,)
    assert jnp.allclose(s1, ref_f32, atol=1e-4, rtol=1e-4), "default path mismatch"

    # 2) In-kernel DMA-gather streaming path, f32 exact.
    s2 = jax.block_until_ready(
        distmult_decode(z, edge_index, edge_type, rel_emb, mode="stream_dma"))
    assert jnp.allclose(s2, ref_f32, atol=1e-4, rtol=1e-4), "dma path mismatch"

    # 3) Fused one-hot MXU-gather path, bf16 transport, f32 accumulation.
    s3 = jax.block_until_ready(
        distmult_decode(z, edge_index, edge_type, rel_emb, mode="fused",
                        transport_dtype=jnp.bfloat16))
    assert jnp.allclose(s3, ref_bf16, atol=1e-4, rtol=1e-4), "fused path mismatch"

    # 4) XLA-gather streaming path with bf16 transport (bf16 VALU multiplies on
    #    v6e/v7x) — loose tolerance covers the bf16-product variant.
    s4 = jax.block_until_ready(
        distmult_decode(z, edge_index, edge_type, rel_emb, mode="stream_xla",
                        transport_dtype=jnp.bfloat16))
    assert jnp.allclose(s4, ref_bf16, atol=6e-2, rtol=6e-2), "stream_xla mismatch"

    print("KERNEL_OK")
</pallas_src>

<mosaic_0001>
module attributes {stable_mosaic.version = 11 : i64} {
  func.func @_distmult_streaming_kernel(%arg0: i32, %arg1: memref<128x32xf32, #tpu.memory_space<vmem>>, %arg2: memref<128x32xf32, #tpu.memory_space<vmem>>, %arg3: memref<128x32xf32, #tpu.memory_space<vmem>>, %arg4: memref<128x1xf32, #tpu.memory_space<vmem>>) attributes {dimension_semantics = [#tpu.dimension_semantics<parallel>], iteration_bounds = array<i64: 1>, scalar_prefetch = 0 : i64, scratch_operands = 0 : i64, tpu.core_type = #tpu.core_type<tc>, window_params = [{transform_indices = @transform_0, window_bounds = array<i64: 128, 32>}, {transform_indices = @transform_1, window_bounds = array<i64: 128, 32>}, {transform_indices = @transform_2, window_bounds = array<i64: 128, 32>}, {transform_indices = @transform_3, window_bounds = array<i64: 128, 1>}]} {
    %c0 = arith.constant 0 : index
    %c0_0 = arith.constant 0 : index
    %0 = vector.load %arg1[%c0, %c0_0] : memref<128x32xf32, #tpu.memory_space<vmem>>, vector<128x32xf32>
    %c0_1 = arith.constant 0 : index
    %c0_2 = arith.constant 0 : index
    %1 = vector.load %arg3[%c0_1, %c0_2] : memref<128x32xf32, #tpu.memory_space<vmem>>, vector<128x32xf32>
    %2 = arith.mulf %0, %1 : vector<128x32xf32>
    %c0_3 = arith.constant 0 : index
    %c0_4 = arith.constant 0 : index
    %3 = vector.load %arg2[%c0_3, %c0_4] : memref<128x32xf32, #tpu.memory_space<vmem>>, vector<128x32xf32>
    %4 = arith.mulf %2, %3 : vector<128x32xf32>
    %cst = arith.constant dense<0.000000e+00> : vector<128xf32>
    %5 = vector.multi_reduction <add>, %4, %cst [1] : vector<128x32xf32> to vector<128xf32>
    %6 = vector.shape_cast %5 : vector<128xf32> to vector<128x1xf32>
    %c0_5 = arith.constant 0 : index
    %c0_6 = arith.constant 0 : index
    %7 = vector.load %arg4[%c0_5, %c0_6] : memref<128x1xf32, #tpu.memory_space<vmem>>, vector<128x1xf32>
    tpu.vector_store %arg4[%c0_5, %c0_6], %6 {strides = array<i32>} : memref<128x1xf32, #tpu.memory_space<vmem>>, vector<128x1xf32>,
    return
  }
  func.func @transform_0(%arg0: i32) -> (i32, i32) {
    %c0_i32 = arith.constant 0 : i32
    %c0_i32_0 = arith.constant 0 : i32
    return %arg0, %c0_i32 : i32, i32
  }
  func.func @transform_1(%arg0: i32) -> (i32, i32) {
    %c0_i32 = arith.constant 0 : i32
    %c0_i32_0 = arith.constant 0 : i32
    return %arg0, %c0_i32 : i32, i32
  }
  func.func @transform_2(%arg0: i32) -> (i32, i32) {
    %c0_i32 = arith.constant 0 : i32
    %c0_i32_0 = arith.constant 0 : i32
    return %arg0, %c0_i32 : i32, i32
  }
  func.func @transform_3(%arg0: i32) -> (i32, i32) {
    %c0_i32 = arith.constant 0 : i32
    %c0_i32_0 = arith.constant 0 : i32
    return %arg0, %c0_i32 : i32, i32
  }
}

</mosaic_0001>

<llo_original>
// kernel: tpu_custom_call.1
$region0: #{tpu_custom_call.1}
  #allocation0 [shape = 'u32[]', space=smem, size = 0x4, offset = 0x4, fixed_abs, tag = 'smem constant byte address 0x4 - core index']
  #allocation1 [shape = 'u32[144,128]{1,0:T(1,128)}', space=vmem, size = 0x12000, scoped, tag = 'internal scratch']
  %s0 = inlined_call_operand.vmem [shape: f32[128,32], index: 0, kind: input, shape index: {}]
  %s1 = inlined_call_operand.vmem [shape: f32[128,32], index: 1, kind: input, shape index: {}]
  %s2 = inlined_call_operand.vmem [shape: f32[128,32], index: 2, kind: input, shape index: {}]
  %s3 = inlined_call_operand.vmem [shape: f32[128,1], index: 3, kind: output, shape index: {}]
  %s4 = sld [smem:[#allocation0]]
  $region22: #{tpu_custom_call.1} parent=0
    _
  %s6 = ssub.s32 1, %s4
  %s7 = scalar_select 0, %s6, %s4
  // Predicated region
  $region2: #{tpu_custom_call.1} parent=0 // pred_check
    _
  $region3: #{tpu_custom_call.1} parent=0 // pred_check_branch
    %9 = sbr.rel (0) target = $region5
  $region4: #{tpu_custom_call.1} parent=0 // pred_region
    _
  $region5: #{tpu_custom_call.1} parent=0 // pred_fallthru
    _
  // Predicated region
  $region6: #{tpu_custom_call.1} parent=0 // pred_check
    _
  $region7: #{tpu_custom_call.1} parent=0 // pred_check_branch
    %11 = sbr.rel (0) target = $region9
  $region8: #{tpu_custom_call.1} parent=0 // pred_region
    _
  $region9: #{tpu_custom_call.1} parent=0 // pred_fallthru
    _
  // Predicated region
  $region10: #{tpu_custom_call.1} parent=0 // pred_check
    _
  $region11: #{tpu_custom_call.1} parent=0 // pred_check_branch
    %13 = sbr.rel (0) target = $region13
  $region12: #{tpu_custom_call.1} parent=0 // pred_region
    _
  $region13: #{tpu_custom_call.1} parent=0 // pred_fallthru
    _
  %v14 = vld [vmem:[%s0] sm:$0xff]
  %v15 = vld [vmem:[%s0 + $0x8] sm:$0xff]
  %v16 = vld [vmem:[%s0 + $0x10] sm:$0xff]
  %v17 = vld [vmem:[%s0 + $0x18] sm:$0xff]
  %v18 = vld [vmem:[%s0 + $0x20] sm:$0xff]
  %v19 = vld [vmem:[%s0 + $0x28] sm:$0xff]
  %v20 = vld [vmem:[%s0 + $0x30] sm:$0xff]
  %v21 = vld [vmem:[%s0 + $0x38] sm:$0xff]
  %v22 = vld [vmem:[%s0 + $0x40] sm:$0xff]
  %v23 = vld [vmem:[%s0 + $0x48] sm:$0xff]
  %v24 = vld [vmem:[%s0 + $0x50] sm:$0xff]
  %v25 = vld [vmem:[%s0 + $0x58] sm:$0xff]
  %v26 = vld [vmem:[%s0 + $0x60] sm:$0xff]
  %v27 = vld [vmem:[%s0 + $0x68] sm:$0xff]
  %v28 = vld [vmem:[%s0 + $0x70] sm:$0xff]
  %v29 = vld [vmem:[%s0 + $0x78] sm:$0xff]
  %v30 = vld [vmem:[%s2] sm:$0xff]
  %v31 = vld [vmem:[%s2 + $0x8] sm:$0xff]
  %v32 = vld [vmem:[%s2 + $0x10] sm:$0xff]
  %v33 = vld [vmem:[%s2 + $0x18] sm:$0xff]
  %v34 = vld [vmem:[%s2 + $0x20] sm:$0xff]
  %v35 = vld [vmem:[%s2 + $0x28] sm:$0xff]
  %v36 = vld [vmem:[%s2 + $0x30] sm:$0xff]
  %v37 = vld [vmem:[%s2 + $0x38] sm:$0xff]
  %v38 = vld [vmem:[%s2 + $0x40] sm:$0xff]
  %v39 = vld [vmem:[%s2 + $0x48] sm:$0xff]
  %v40 = vld [vmem:[%s2 + $0x50] sm:$0xff]
  %v41 = vld [vmem:[%s2 + $0x58] sm:$0xff]
  %v42 = vld [vmem:[%s2 + $0x60] sm:$0xff]
  %v43 = vld [vmem:[%s2 + $0x68] sm:$0xff]
  %v44 = vld [vmem:[%s2 + $0x70] sm:$0xff]
  %v45 = vld [vmem:[%s2 + $0x78] sm:$0xff]
  %v46 = vmul.f32 %v14, %v30
  %v47 = vmul.f32 %v15, %v31
  %v48 = vmul.f32 %v16, %v32
  %v49 = vmul.f32 %v17, %v33
  %v50 = vmul.f32 %v18, %v34
  %v51 = vmul.f32 %v19, %v35
  %v52 = vmul.f32 %v20, %v36
  %v53 = vmul.f32 %v21, %v37
  %v54 = vmul.f32 %v22, %v38
  %v55 = vmul.f32 %v23, %v39
  %v56 = vmul.f32 %v24, %v40
  %v57 = vmul.f32 %v25, %v41
  %v58 = vmul.f32 %v26, %v42
  %v59 = vmul.f32 %v27, %v43
  %v60 = vmul.f32 %v28, %v44
  %v61 = vmul.f32 %v29, %v45
  %v62 = vld [vmem:[%s1] sm:$0xff]
  %v63 = vld [vmem:[%s1 + $0x8] sm:$0xff]
  %v64 = vld [vmem:[%s1 + $0x10] sm:$0xff]
  %v65 = vld [vmem:[%s1 + $0x18] sm:$0xff]
  %v66 = vld [vmem:[%s1 + $0x20] sm:$0xff]
  %v67 = vld [vmem:[%s1 + $0x28] sm:$0xff]
  %v68 = vld [vmem:[%s1 + $0x30] sm:$0xff]
  %v69 = vld [vmem:[%s1 + $0x38] sm:$0xff]
  %v70 = vld [vmem:[%s1 + $0x40] sm:$0xff]
  %v71 = vld [vmem:[%s1 + $0x48] sm:$0xff]
  %v72 = vld [vmem:[%s1 + $0x50] sm:$0xff]
  %v73 = vld [vmem:[%s1 + $0x58] sm:$0xff]
  %v74 = vld [vmem:[%s1 + $0x60] sm:$0xff]
  %v75 = vld [vmem:[%s1 + $0x68] sm:$0xff]
  %v76 = vld [vmem:[%s1 + $0x70] sm:$0xff]
  %v77 = vld [vmem:[%s1 + $0x78] sm:$0xff]
  %v78 = vmul.f32 %v46, %v62
  %v79 = vmul.f32 %v47, %v63
  %v80 = vmul.f32 %v48, %v64
  %v81 = vmul.f32 %v49, %v65
  %v82 = vmul.f32 %v50, %v66
  %v83 = vmul.f32 %v51, %v67
  %v84 = vmul.f32 %v52, %v68
  %v85 = vmul.f32 %v53, %v69
  %v86 = vmul.f32 %v54, %v70
  %v87 = vmul.f32 %v55, %v71
  %v88 = vmul.f32 %v56, %v72
  %v89 = vmul.f32 %v57, %v73
  %v90 = vmul.f32 %v58, %v74
  %v91 = vmul.f32 %v59, %v75
  %v92 = vmul.f32 %v60, %v76
  %v93 = vmul.f32 %v61, %v77
  %vm94 = vcmask 261120
  %v95 = vsel %vm94, %v78, 0.0
  %96 = vadd.xlane.f32.xlu0 %v95
  %v97 = vpop.xlane.xlu0 %96
  %v98 = vsel %vm94, %v79, 0.0
  %99 = vadd.xlane.f32.xlu0 %v98
  %v100 = vpop.xlane.xlu0 %99
  %v101 = vsel %vm94, %v80, 0.0
  %102 = vadd.xlane.f32.xlu0 %v101
  %v103 = vpop.xlane.xlu0 %102
  %v104 = vsel %vm94, %v81, 0.0
  %105 = vadd.xlane.f32.xlu0 %v104
  %v106 = vpop.xlane.xlu0 %105
  %v107 = vsel %vm94, %v82, 0.0
  %108 = vadd.xlane.f32.xlu0 %v107
  %v109 = vpop.xlane.xlu0 %108
  %v110 = vsel %vm94, %v83, 0.0
  %111 = vadd.xlane.f32.xlu0 %v110
  %v112 = vpop.xlane.xlu0 %111
  %v113 = vsel %vm94, %v84, 0.0
  %114 = vadd.xlane.f32.xlu0 %v113
  %v115 = vpop.xlane.xlu0 %114
  %v116 = vsel %vm94, %v85, 0.0
  %117 = vadd.xlane.f32.xlu0 %v116
  %v118 = vpop.xlane.xlu0 %117
  %v119 = vsel %vm94, %v86, 0.0
  %120 = vadd.xlane.f32.xlu0 %v119
  %v121 = vpop.xlane.xlu0 %120
  %v122 = vsel %vm94, %v87, 0.0
  %123 = vadd.xlane.f32.xlu0 %v122
  %v124 = vpop.xlane.xlu0 %123
  %v125 = vsel %vm94, %v88, 0.0
  %126 = vadd.xlane.f32.xlu0 %v125
  %v127 = vpop.xlane.xlu0 %126
  %v128 = vsel %vm94, %v89, 0.0
  %129 = vadd.xlane.f32.xlu0 %v128
  %v130 = vpop.xlane.xlu0 %129
  %v131 = vsel %vm94, %v90, 0.0
  %132 = vadd.xlane.f32.xlu0 %v131
  %v133 = vpop.xlane.xlu0 %132
  %v134 = vsel %vm94, %v91, 0.0
  %135 = vadd.xlane.f32.xlu0 %v134
  %v136 = vpop.xlane.xlu0 %135
  %v137 = vsel %vm94, %v92, 0.0
  %138 = vadd.xlane.f32.xlu0 %v137
  %v139 = vpop.xlane.xlu0 %138
  %v140 = vsel %vm94, %v93, 0.0
  %141 = vadd.xlane.f32.xlu0 %v140
  %v142 = vpop.xlane.xlu0 %141
  %vm143 = vcmask 7168
  %144 = vst.msk [vmem:[%s3] sm:$0xff] %vm143, %v97
  %145 = vst.msk [vmem:[%s3 + $0x8] sm:$0xff] %vm143, %v100
  %146 = vst.msk [vmem:[%s3 + $0x10] sm:$0xff] %vm143, %v103
  %147 = vst.msk [vmem:[%s3 + $0x18] sm:$0xff] %vm143, %v106
  %148 = vst.msk [vmem:[%s3 + $0x20] sm:$0xff] %vm143, %v109
  %149 = vst.msk [vmem:[%s3 + $0x28] sm:$0xff] %vm143, %v112
  %150 = vst.msk [vmem:[%s3 + $0x30] sm:$0xff] %vm143, %v115
  %151 = vst.msk [vmem:[%s3 + $0x38] sm:$0xff] %vm143, %v118
  %152 = vst.msk [vmem:[%s3 + $0x40] sm:$0xff] %vm143, %v121
  %153 = vst.msk [vmem:[%s3 + $0x48] sm:$0xff] %vm143, %v124
  %154 = vst.msk [vmem:[%s3 + $0x50] sm:$0xff] %vm143, %v127
  %155 = vst.msk [vmem:[%s3 + $0x58] sm:$0xff] %vm143, %v130
  %156 = vst.msk [vmem:[%s3 + $0x60] sm:$0xff] %vm143, %v133
  %157 = vst.msk [vmem:[%s3 + $0x68] sm:$0xff] %vm143, %v136
  %158 = vst.msk [vmem:[%s3 + $0x70] sm:$0xff] %vm143, %v139
  %159 = vst.msk [vmem:[%s3 + $0x78] sm:$0xff] %vm143, %v142
  // Predicated region
  $region14: #{tpu_custom_call.1} parent=0 // pred_check
    _
  $region15: #{tpu_custom_call.1} parent=0 // pred_check_branch
    %161 = sbr.rel (0) target = $region17
  $region16: #{tpu_custom_call.1} parent=0 // pred_region
    _
  $region17: #{tpu_custom_call.1} parent=0 // pred_fallthru
    _
  // Predicated region
  $region18: #{tpu_custom_call.1} parent=0 // pred_check
    _
  $region19: #{tpu_custom_call.1} parent=0 // pred_check_branch
    %163 = sbr.rel (0) target = $region21
  $region20: #{tpu_custom_call.1} parent=0 // pred_region
    _
  $region21: #{tpu_custom_call.1} parent=0 // pred_fallthru
    _

</llo_original>
